<compile_context>
chip_gen: v7x
topology: tpu7x:2x2x1
jax: 0.10.0
libtpu: 0.0.40
codegen_flags: <defaults>
</compile_context>

<pallas_src>
import math

import jax
import jax.numpy as jnp
from jax.experimental import pallas as pl
from jax.experimental.pallas import tpu as pltpu


def _round_up(x, m):
    return ((x + m - 1) // m) * m


def interface_kernel(inv_max_ref, act_ref, w1_ref, b1_ref, w2_ref, b2_ref, o_ref):
    # Scalar-prefetched global normalizer (1 / act.max() over the *whole* batch).
    inv_max = inv_max_ref[0]

    # Normalize this batch tile.
    act = act_ref[...] * inv_max                                   # (TB, F_pad)

    # Hidden Linear + ReLU (dropout p=0.0 in eval mode is identity).
    h = jnp.dot(act, w1_ref[...], preferred_element_type=jnp.float32) + b1_ref[...]
    h = jnp.maximum(h, 0.0)

    # Output Linear.
    out = jnp.dot(h, w2_ref[...], preferred_element_type=jnp.float32) + b2_ref[...]

    # _activation_to_spike: threshold at 0.5. Lane-dense (O padded to 128) store.
    o_ref[...] = (out > 0.5).astype(o_ref.dtype)


def interface_layer_forward(x, w1, b1, w2, b2, *, block_b=512):
    """x: (B, input_size, T) float32 spike trains.
    w1: (input_size, hidden) pre-transposed; b1: (1, hidden);
    w2: (hidden, output_size); b2: (1, output_size).
    Returns (B, output_size) float32 spikes."""
    B, F, T = x.shape
    H = w1.shape[1]
    O = w2.shape[1]

    # --- wrapper-side preprocessing (fused by XLA) ---
    # Collapse the time window and compute the global normalizer once.
    act = jnp.sum(x.astype(jnp.float32), axis=-1)                  # (B, F)
    inv_max = (1.0 / jnp.max(act)).reshape(1).astype(jnp.float32)  # scalar-prefetch arg

    # --- lane/sublane-friendly padding (zeros do not perturb real outputs) ---
    F_pad = _round_up(F, 128)
    H_pad = _round_up(H, 128)
    O_pad = _round_up(O, 128)
    TB = min(block_b, _round_up(B, 8))         # batch tile, multiple of 8 sublanes
    B_pad = _round_up(B, TB)

    act_p = jnp.zeros((B_pad, F_pad), jnp.float32).at[:B, :F].set(act)
    w1_p = jnp.zeros((F_pad, H_pad), jnp.float32).at[:F, :H].set(w1)
    b1_p = jnp.zeros((1, H_pad), jnp.float32).at[:, :H].set(b1)
    w2_p = jnp.zeros((H_pad, O_pad), jnp.float32).at[:H, :O].set(w2)
    b2_p = jnp.zeros((1, O_pad), jnp.float32).at[:, :O].set(b2)

    flops = 2 * B_pad * F_pad * H_pad + 2 * B_pad * H_pad * O_pad
    bytes_accessed = 4 * (B_pad * F_pad + F_pad * H_pad + H_pad * O_pad
                          + H_pad + O_pad + B_pad * O_pad)

    out_p = pl.pallas_call(
        interface_kernel,
        out_shape=jax.ShapeDtypeStruct((B_pad, O_pad), jnp.float32),
        grid_spec=pltpu.PrefetchScalarGridSpec(
            num_scalar_prefetch=1,              # inv_max lands in SMEM
            grid=(B_pad // TB,),                # tile over batch
            in_specs=[
                pl.BlockSpec((TB, F_pad), lambda i, inv: (i, 0)),      # activations: streamed
                pl.BlockSpec((F_pad, H_pad), lambda i, inv: (0, 0)),   # W1: resident
                pl.BlockSpec((1, H_pad), lambda i, inv: (0, 0)),       # b1: resident
                pl.BlockSpec((H_pad, O_pad), lambda i, inv: (0, 0)),   # W2: resident
                pl.BlockSpec((1, O_pad), lambda i, inv: (0, 0)),       # b2: resident
            ],
            out_specs=pl.BlockSpec((TB, O_pad), lambda i, inv: (i, 0)),
        ),
        compiler_params=pltpu.CompilerParams(
            dimension_semantics=("parallel",),  # batch axis -> megacore-shardable on v7x
        ),
        cost_estimate=pl.CostEstimate(
            flops=flops, transcendentals=0, bytes_accessed=bytes_accessed),
    )(inv_max, act_p, w1_p, b1_p, w2_p, b2_p)

    return out_p[:B, :O]


def init_linear(key, fan_in, fan_out):
    """PyTorch nn.Linear default init: U(-1/sqrt(fan_in), 1/sqrt(fan_in)).
    Weight returned as (fan_in, fan_out) (pre-transposed), bias as (1, fan_out)."""
    kw, kb = jax.random.split(key)
    bound = 1.0 / math.sqrt(fan_in)
    w = jax.random.uniform(kw, (fan_in, fan_out), jnp.float32, -bound, bound)
    b = jax.random.uniform(kb, (1, fan_out), jnp.float32, -bound, bound)
    return w, b


if __name__ == "__main__":
    # Module config: input_size=32, output_size=16, hidden_size=32, num_layers=1,
    # activation='relu', dropout=0.0 (eval mode -> identity).
    B, INPUT_SIZE, T = 2, 32, 8
    HIDDEN_SIZE, OUTPUT_SIZE = 32, 16

    key = jax.random.PRNGKey(0)
    kx, k1, k2 = jax.random.split(key, 3)

    # Spike-train input: binary {0,1} spikes over a time window of length T.
    x = jax.random.bernoulli(kx, p=0.5, shape=(B, INPUT_SIZE, T)).astype(jnp.float32)

    w1, b1 = init_linear(k1, INPUT_SIZE, HIDDEN_SIZE)
    w2, b2 = init_linear(k2, HIDDEN_SIZE, OUTPUT_SIZE)

    out = interface_layer_forward(x, w1, b1, w2, b2)
    out = jax.block_until_ready(out)

    # Pure-JAX reference (same math as the PyTorch forward in eval mode).
    act_ref = x.sum(-1)
    act_ref = act_ref * (1.0 / act_ref.max())
    h_ref = jnp.maximum(act_ref @ w1 + b1, 0.0)
    ref = ((h_ref @ w2 + b2) > 0.5).astype(jnp.float32)

    assert out.shape == (B, OUTPUT_SIZE)
    assert jnp.array_equal(out, ref)

    print("KERNEL_OK")
</pallas_src>

<mosaic_0001>
module attributes {stable_mosaic.version = 11 : i64} {
  func.func @interface_kernel(%arg0: i32, %arg1: memref<1xf32, #tpu.memory_space<smem>>, %arg2: memref<8x128xf32, #tpu.memory_space<vmem>>, %arg3: memref<128x128xf32, #tpu.memory_space<vmem>>, %arg4: memref<1x128xf32, #tpu.memory_space<vmem>>, %arg5: memref<128x128xf32, #tpu.memory_space<vmem>>, %arg6: memref<1x128xf32, #tpu.memory_space<vmem>>, %arg7: memref<8x128xf32, #tpu.memory_space<vmem>>) attributes {dimension_semantics = [#tpu.dimension_semantics<parallel>], iteration_bounds = array<i64: 1>, scalar_prefetch = 1 : i64, scratch_operands = 0 : i64, tpu.core_type = #tpu.core_type<tc>, window_params = [{transform_indices = @transform_0, window_bounds = array<i64: 8, 128>}, {pipeline_mode = #tpu.pipeline_mode<synchronous>, transform_indices = @transform_1, window_bounds = array<i64: 128, 128>}, {pipeline_mode = #tpu.pipeline_mode<synchronous>, transform_indices = @transform_2, window_bounds = array<i64: 1, 128>}, {pipeline_mode = #tpu.pipeline_mode<synchronous>, transform_indices = @transform_3, window_bounds = array<i64: 128, 128>}, {pipeline_mode = #tpu.pipeline_mode<synchronous>, transform_indices = @transform_4, window_bounds = array<i64: 1, 128>}, {transform_indices = @transform_5, window_bounds = array<i64: 8, 128>}]} {
    %c0 = arith.constant 0 : index
    %0 = memref.load %arg1[%c0] : memref<1xf32, #tpu.memory_space<smem>>
    %c0_0 = arith.constant 0 : index
    %c0_1 = arith.constant 0 : index
    %1 = vector.load %arg2[%c0_0, %c0_1] : memref<8x128xf32, #tpu.memory_space<vmem>>, vector<8x128xf32>
    %2 = vector.broadcast %0 : f32 to vector<8x128xf32>
    %3 = arith.mulf %1, %2 : vector<8x128xf32>
    %c0_2 = arith.constant 0 : index
    %c0_3 = arith.constant 0 : index
    %4 = vector.load %arg3[%c0_2, %c0_3] : memref<128x128xf32, #tpu.memory_space<vmem>>, vector<128x128xf32>
    %cst = arith.constant dense<0.000000e+00> : vector<8x128xf32>
    %5 = tpu.matmul %3, %4, %cst {dimension_numbers = #tpu.dot_dimension_numbers<[1], [0], [0], [1], [0, 0, 1, 1], [], []>} : vector<8x128xf32>, vector<128x128xf32>, vector<8x128xf32> -> vector<8x128xf32>
    %c0_4 = arith.constant 0 : index
    %c0_5 = arith.constant 0 : index
    %6 = vector.load %arg4[%c0_4, %c0_5] : memref<1x128xf32, #tpu.memory_space<vmem>>, vector<1x128xf32>
    %7 = vector.broadcast %6 : vector<1x128xf32> to vector<8x128xf32>
    %8 = arith.addf %5, %7 : vector<8x128xf32>
    %cst_6 = arith.constant 0.000000e+00 : f32
    %9 = vector.broadcast %cst_6 : f32 to vector<8x128xf32>
    %10 = arith.maximumf %8, %9 : vector<8x128xf32>
    %c0_7 = arith.constant 0 : index
    %c0_8 = arith.constant 0 : index
    %11 = vector.load %arg5[%c0_7, %c0_8] : memref<128x128xf32, #tpu.memory_space<vmem>>, vector<128x128xf32>
    %cst_9 = arith.constant dense<0.000000e+00> : vector<8x128xf32>
    %12 = tpu.matmul %10, %11, %cst_9 {dimension_numbers = #tpu.dot_dimension_numbers<[1], [0], [0], [1], [0, 0, 1, 1], [], []>} : vector<8x128xf32>, vector<128x128xf32>, vector<8x128xf32> -> vector<8x128xf32>
    %c0_10 = arith.constant 0 : index
    %c0_11 = arith.constant 0 : index
    %13 = vector.load %arg6[%c0_10, %c0_11] : memref<1x128xf32, #tpu.memory_space<vmem>>, vector<1x128xf32>
    %14 = vector.broadcast %13 : vector<1x128xf32> to vector<8x128xf32>
    %15 = arith.addf %12, %14 : vector<8x128xf32>
    %cst_12 = arith.constant 5.000000e-01 : f32
    %16 = vector.broadcast %cst_12 : f32 to vector<8x128xf32>
    %17 = arith.cmpf ogt, %15, %16 : vector<8x128xf32>
    %18 = arith.extui %17 : vector<8x128xi1> to vector<8x128xi32>
    %19 = arith.sitofp %18 : vector<8x128xi32> to vector<8x128xf32>
    %c0_13 = arith.constant 0 : index
    %c0_14 = arith.constant 0 : index
    %20 = vector.load %arg7[%c0_13, %c0_14] : memref<8x128xf32, #tpu.memory_space<vmem>>, vector<8x128xf32>
    tpu.vector_store %arg7[%c0_13, %c0_14], %19 {strides = array<i32>} : memref<8x128xf32, #tpu.memory_space<vmem>>, vector<8x128xf32>,
    return
  }
  func.func @transform_0(%arg0: i32, %arg1: memref<1xf32, #tpu.memory_space<smem>>) -> (i32, i32) {
    %c0_i32 = arith.constant 0 : i32
    %c0_i32_0 = arith.constant 0 : i32
    return %arg0, %c0_i32 : i32, i32
  }
  func.func @transform_1(%arg0: i32, %arg1: memref<1xf32, #tpu.memory_space<smem>>) -> (i32, i32) {
    %c0_i32 = arith.constant 0 : i32
    %c0_i32_0 = arith.constant 0 : i32
    %c0_i32_1 = arith.constant 0 : i32
    return %c0_i32, %c0_i32_0 : i32, i32
  }
  func.func @transform_2(%arg0: i32, %arg1: memref<1xf32, #tpu.memory_space<smem>>) -> (i32, i32) {
    %c0_i32 = arith.constant 0 : i32
    %c0_i32_0 = arith.constant 0 : i32
    %c0_i32_1 = arith.constant 0 : i32
    return %c0_i32, %c0_i32_0 : i32, i32
  }
  func.func @transform_3(%arg0: i32, %arg1: memref<1xf32, #tpu.memory_space<smem>>) -> (i32, i32) {
    %c0_i32 = arith.constant 0 : i32
    %c0_i32_0 = arith.constant 0 : i32
    %c0_i32_1 = arith.constant 0 : i32
    return %c0_i32, %c0_i32_0 : i32, i32
  }
  func.func @transform_4(%arg0: i32, %arg1: memref<1xf32, #tpu.memory_space<smem>>) -> (i32, i32) {
    %c0_i32 = arith.constant 0 : i32
    %c0_i32_0 = arith.constant 0 : i32
    %c0_i32_1 = arith.constant 0 : i32
    return %c0_i32, %c0_i32_0 : i32, i32
  }
  func.func @transform_5(%arg0: i32, %arg1: memref<1xf32, #tpu.memory_space<smem>>) -> (i32, i32) {
    %c0_i32 = arith.constant 0 : i32
    %c0_i32_0 = arith.constant 0 : i32
    return %arg0, %c0_i32 : i32, i32
  }
}

</mosaic_0001>

<llo_original>
// kernel: tpu_custom_call.1
$region0: #{tpu_custom_call.1}
  #allocation0 [shape = 'u32[]', space=smem, size = 0x4, offset = 0x4, fixed_abs, tag = 'smem constant byte address 0x4 - core index']
  #allocation1 [shape = 'u32[144,128]{1,0:T(1,128)}', space=vmem, size = 0x12000, scoped, tag = 'internal scratch']
  #allocation2 [shape = 's32[1]{0}', space=sflag, size = 0x4, scoped, tag = 'scoped memory for tpu_custom_call.1']
  #allocation3 [shape = 'f32[1]{0:T(128)S(6)}', space=smem, size = 0x200, scoped, tag = 'prefetched SMEM operand 0']
  %s0 = inlined_call_operand.<no memory space> [shape: f32[1], index: 0, kind: input, shape index: {}]
  %s1 = inlined_call_operand.hbm [shape: f32[8,128], index: 1, kind: input, shape index: {}]
  %s2 = inlined_call_operand.hbm [shape: f32[128,128], index: 2, kind: input, shape index: {}]
  %s3 = inlined_call_operand.vmem [shape: f32[1,128], index: 3, kind: input, shape index: {}]
  %s4 = inlined_call_operand.hbm [shape: f32[128,128], index: 4, kind: input, shape index: {}]
  %s5 = inlined_call_operand.vmem [shape: f32[1,128], index: 5, kind: input, shape index: {}]
  %s6 = inlined_call_operand.hbm [shape: f32[8,128], index: 6, kind: output, shape index: {}]
  %s7 = sld [smem:[#allocation0]]
  $region42: #{tpu_custom_call.1} parent=0
    _
  %s9 = ssub.s32 1, %s7
  %s10 = scalar_select 0, %s9, %s7
  %11 = sst [smem:[#allocation3]] %s0
  $region1: #{tpu_custom_call.1} parent=0
    #allocation4 [shape = 'u8[4096]{0}', space=vmem, size = 0x1000, scoped, tag = 'input window, operand 1, single buffered']
    #allocation5 [shape = 's32[1]{0}', space=sflag, size = 0x4, scoped, tag = 'scoped memory for tpu_custom_call.1']
    #allocation6 [shape = 's32[1]{0}', space=sflag, size = 0x4, scoped, tag = 'scoped memory for tpu_custom_call.1']
    #allocation7 [shape = 'u8[65536]{0}', space=vmem, size = 0x10000, scoped, tag = 'input window, operand 2, single buffered']
    #allocation8 [shape = 's32[1]{0}', space=sflag, size = 0x4, scoped, tag = 'scoped memory for tpu_custom_call.1']
    #allocation9 [shape = 'u8[65536]{0}', space=vmem, size = 0x10000, scoped, tag = 'input window, operand 4, single buffered']
    #allocation10 [shape = 'u8[4096]{0}', space=vmem, size = 0x1000, scoped, tag = 'output window, operand 0, single buffered']
    %12 = vsyncpa [#allocation5], 0
    %13 = vsyncpa [#allocation8], 0
    %14 = vsyncpa [#allocation6], 0
    // Predicated region
    $region2: #{tpu_custom_call.1} parent=1 // pred_check
      _
    $region3: #{tpu_custom_call.1} parent=1 // pred_check_branch
      %16 = sbr.rel (0) target = $region5
    $region4: #{tpu_custom_call.1} parent=1 // pred_region
      %s18 = ssub.s32 128, 128
      %19 = vsyncadd [#allocation5], %s18
      %s21 = sshll.u32 [#allocation4], 4
      %s22 = int_to_ptr.vmem [resolvable:$true] %s21
      %24 = dma.hbm_to_vmem [thread:$0]  %s1, 128, %s22, [#allocation5]
    $region5: #{tpu_custom_call.1} parent=1 // pred_fallthru
      _
    // Predicated region
    $region6: #{tpu_custom_call.1} parent=1 // pred_check
      _
    $region7: #{tpu_custom_call.1} parent=1 // pred_check_branch
      %26 = sbr.rel (0) target = $region9
    $region8: #{tpu_custom_call.1} parent=1 // pred_region
      %s28 = ssub.s32 2048, 2048
      %29 = vsyncadd [#allocation8], %s28
      %s30 = sshll.u32 [#allocation7], 4
      %s31 = int_to_ptr.vmem [resolvable:$true] %s30
      %36 = dma.hbm_to_vmem [thread:$0]  %s2, 2048, %s31, [#allocation8], 128, 128, 8
    $region9: #{tpu_custom_call.1} parent=1 // pred_fallthru
      _
    // Predicated region
    $region10: #{tpu_custom_call.1} parent=1 // pred_check
      _
    $region11: #{tpu_custom_call.1} parent=1 // pred_check_branch
      %38 = sbr.rel (0) target = $region13
    $region12: #{tpu_custom_call.1} parent=1 // pred_region
      _
    $region13: #{tpu_custom_call.1} parent=1 // pred_fallthru
      _
    // Predicated region
    $region14: #{tpu_custom_call.1} parent=1 // pred_check
      _
    $region15: #{tpu_custom_call.1} parent=1 // pred_check_branch
      %40 = sbr.rel (0) target = $region17
    $region16: #{tpu_custom_call.1} parent=1 // pred_region
      %s42 = ssub.s32 2048, 2048
      %43 = vsyncadd [#allocation8], %s42
      %s44 = sshll.u32 [#allocation9], 4
      %s45 = int_to_ptr.vmem [resolvable:$true] %s44
      %50 = dma.hbm_to_vmem [thread:$0]  %s4, 2048, %s45, [#allocation8], 128, 128, 8
    $region17: #{tpu_custom_call.1} parent=1 // pred_fallthru
      _
    // Predicated region
    $region18: #{tpu_custom_call.1} parent=1 // pred_check
      _
    $region19: #{tpu_custom_call.1} parent=1 // pred_check_branch
      %52 = sbr.rel (0) target = $region21
    $region20: #{tpu_custom_call.1} parent=1 // pred_region
      _
    $region21: #{tpu_custom_call.1} parent=1 // pred_fallthru
      _
    // Predicated region
    $region22: #{tpu_custom_call.1} parent=1 // pred_check
      _
    $region23: #{tpu_custom_call.1} parent=1 // pred_check_branch
      %54 = sbr.rel (0) target = $region25
    $region24: #{tpu_custom_call.1} parent=1 // pred_region
      %55 = dma.done [#allocation5], 128
    $region25: #{tpu_custom_call.1} parent=1 // pred_fallthru
      _
    // Predicated region
    $region26: #{tpu_custom_call.1} parent=1 // pred_check
      _
    $region27: #{tpu_custom_call.1} parent=1 // pred_check_branch
      %57 = sbr.rel (0) target = $region29
    $region28: #{tpu_custom_call.1} parent=1 // pred_region
      %58 = dma.done [#allocation8], 2048
    $region29: #{tpu_custom_call.1} parent=1 // pred_fallthru
      _
    // Predicated region
    $region30: #{tpu_custom_call.1} parent=1 // pred_check
      _
    $region31: #{tpu_custom_call.1} parent=1 // pred_check_branch
      %60 = sbr.rel (0) target = $region33
    $region32: #{tpu_custom_call.1} parent=1 // pred_region
      %61 = dma.done [#allocation8], 2048
    $region33: #{tpu_custom_call.1} parent=1 // pred_fallthru
      _
    %s62 = sld [smem:[#allocation3]]
    %v63 = vld [vmem:[#allocation4] sm:$0xff]
    %v64 = vstv %s62
    %v65 = vmul.f32 %v63, %v64
    %v66 = vld [vmem:[#allocation7] sm:$0xff]
    %v67 = vld [vmem:[#allocation7 + $0x8] sm:$0xff]
    %v68 = vld [vmem:[#allocation7 + $0x10] sm:$0xff]
    %v69 = vld [vmem:[#allocation7 + $0x18] sm:$0xff]
    %v70 = vld [vmem:[#allocation7 + $0x20] sm:$0xff]
    %v71 = vld [vmem:[#allocation7 + $0x28] sm:$0xff]
    %v72 = vld [vmem:[#allocation7 + $0x30] sm:$0xff]
    %v73 = vld [vmem:[#allocation7 + $0x38] sm:$0xff]
    %v74 = vld [vmem:[#allocation7 + $0x40] sm:$0xff]
    %v75 = vld [vmem:[#allocation7 + $0x48] sm:$0xff]
    %v76 = vld [vmem:[#allocation7 + $0x50] sm:$0xff]
    %v77 = vld [vmem:[#allocation7 + $0x58] sm:$0xff]
    %v78 = vld [vmem:[#allocation7 + $0x60] sm:$0xff]
    %v79 = vld [vmem:[#allocation7 + $0x68] sm:$0xff]
    %v80 = vld [vmem:[#allocation7 + $0x70] sm:$0xff]
    %v81 = vld [vmem:[#allocation7 + $0x78] sm:$0xff]
    %v82 = vld [vmem:[%s3] sm:$0x1]
    %v84 = vlaneseq
    %v85 = vshrl.u32 %v84, 7
    %v86 = vsub.s32 0, %v85
    %v87 = vrot.slane %v82, %v86
    %89 = vmatprep.subr.mxu0 0.0
    %90 = vmatpush1.msra.mxu0 %v66
    %91 = vmatprep.subr.mxu0 0.0
    %92 = vmatpush1.msra.mxu0 %v67
    %93 = vmatprep.subr.mxu0 0.0
    %94 = vmatpush1.msra.mxu0 %v68
    %95 = vmatprep.subr.mxu0 0.0
    %96 = vmatpush1.msra.mxu0 %v69
    %97 = vmatprep.subr.mxu0 0.0
    %98 = vmatpush1.msra.mxu0 %v70
    %99 = vmatprep.subr.mxu0 0.0
    %100 = vmatpush1.msra.mxu0 %v71
    %101 = vmatprep.subr.mxu0 0.0
    %102 = vmatpush1.msra.mxu0 %v72
    %103 = vmatprep.subr.mxu0 0.0
    %104 = vmatpush1.msra.mxu0 %v73
    %105 = vmatprep.subr.mxu0 0.0
    %106 = vmatpush1.msra.mxu0 %v74
    %107 = vmatprep.subr.mxu0 0.0
    %108 = vmatpush1.msra.mxu0 %v75
    %109 = vmatprep.subr.mxu0 0.0
    %110 = vmatpush1.msra.mxu0 %v76
    %111 = vmatprep.subr.mxu0 0.0
    %112 = vmatpush1.msra.mxu0 %v77
    %113 = vmatprep.subr.mxu0 0.0
    %114 = vmatpush1.msra.mxu0 %v78
    %115 = vmatprep.subr.mxu0 0.0
    %116 = vmatpush1.msra.mxu0 %v79
    %117 = vmatprep.subr.mxu0 0.0
    %118 = vmatpush1.msra.mxu0 %v80
    %119 = vmatprep.subr.mxu0 0.0
    %120 = vmatpush1.msra.mxu0 %v81
    %121 = vmatprep.subr.mxu0 0.0
    %122 = vmatpush1.msra.mxu0 0.0
    %123 = vmatprep.subr.mxu0 0.0
    %124 = vmatpush1.msra.mxu0 0.0
    %125 = vmatprep.subr.mxu0 0.0
    %126 = vmatpush1.msra.mxu0 0.0
    %127 = vmatprep.subr.mxu0 0.0
    %128 = vmatpush1.msra.mxu0 0.0
    %129 = vmatprep.subr.mxu0 0.0
    %130 = vmatpush1.msra.mxu0 0.0
    %131 = vmatprep.subr.mxu0 0.0
    %132 = vmatpush1.msra.mxu0 0.0
    %133 = vmatprep.subr.mxu0 0.0
    %134 = vmatpush1.msra.mxu0 0.0
    %135 = vmatprep.subr.mxu0 0.0
    %136 = vmatpush1.msra.mxu0 0.0
    %137 = vmatprep.subr.mxu0 0.0
    %138 = vmatpush1.msra.mxu0 0.0
    %139 = vmatprep.subr.mxu0 0.0
    %140 = vmatpush1.msra.mxu0 0.0
    %141 = vmatprep.subr.mxu0 0.0
    %142 = vmatpush1.msra.mxu0 0.0
    %143 = vmatprep.subr.mxu0 0.0
    %144 = vmatpush1.msra.mxu0 0.0
    %145 = vmatprep.subr.mxu0 0.0
    %146 = vmatpush1.msra.mxu0 0.0
    %147 = vmatprep.subr.mxu0 0.0
    %148 = vmatpush1.msra.mxu0 0.0
    %149 = vmatprep.subr.mxu0 0.0
    %150 = vmatpush1.msra.mxu0 0.0
    %151 = vmatprep.subr.mxu0 0.0
    %152 = vmatpush1.msra.mxu0 0.0
    %153 = vmatprep.mubr.f32.mxu0 0.0
    %154 = vmatmul.mubr.f32.gmra.mrb[0].mxu0 %v65
    %v155 = vpop.f32.mrb[0].mxu0
    %v156 = vadd.f32 %v87, %v155
    %v157 = vpop.f32.mrb[0].mxu0
    %158 = vdwg.mxu0
    %v159 = vmax.f32 %v156, 0.0
    %v160 = vld [vmem:[#allocation9] sm:$0xff]
    %v161 = vld [vmem:[#allocation9 + $0x8] sm:$0xff]
    %v162 = vld [vmem:[#allocation9 + $0x10] sm:$0xff]
    %v163 = vld [vmem:[#allocation9 + $0x18] sm:$0xff]
    %v164 = vld [vmem:[#allocation9 + $0x20] sm:$0xff]
    %v165 = vld [vmem:[#allocation9 + $0x28] sm:$0xff]
    %v166 = vld [vmem:[#allocation9 + $0x30] sm:$0xff]
    %v167 = vld [vmem:[#allocation9 + $0x38] sm:$0xff]
    %v168 = vld [vmem:[#allocation9 + $0x40] sm:$0xff]
    %v169 = vld [vmem:[#allocation9 + $0x48] sm:$0xff]
    %v170 = vld [vmem:[#allocation9 + $0x50] sm:$0xff]
    %v171 = vld [vmem:[#allocation9 + $0x58] sm:$0xff]
    %v172 = vld [vmem:[#allocation9 + $0x60] sm:$0xff]
    %v173 = vld [vmem:[#allocation9 + $0x68] sm:$0xff]
    %v174 = vld [vmem:[#allocation9 + $0x70] sm:$0xff]
    %v175 = vld [vmem:[#allocation9 + $0x78] sm:$0xff]
    %v176 = vld [vmem:[%s5] sm:$0x1]
    %v178 = vlaneseq
    %v179 = vshrl.u32 %v178, 7
    %v180 = vsub.s32 0, %v179
    %v181 = vrot.slane %v176, %v180
    %183 = vmatprep.subr.mxu0 0.0
    %184 = vmatpush1.msra.mxu0 %v160
    %185 = vmatprep.subr.mxu0 0.0
    %186 = vmatpush1.msra.mxu0 %v161
    %187 = vmatprep.subr.mxu0 0.0
    %188 = vmatpush1.msra.mxu0 %v162
    %189 = vmatprep.subr.mxu0 0.0
    %190 = vmatpush1.msra.mxu0 %v163
    %191 = vmatprep.subr.mxu0 0.0
    %192 = vmatpush1.msra.mxu0 %v164
    %193 = vmatprep.subr.mxu0 0.0
    %194 = vmatpush1.msra.mxu0 %v165
    %195 = vmatprep.subr.mxu0 0.0
    %196 = vmatpush1.msra.mxu0 %v166
    %197 = vmatprep.subr.mxu0 0.0
    %198 = vmatpush1.msra.mxu0 %v167
    %199 = vmatprep.subr.mxu0 0.0
    %200 = vmatpush1.msra.mxu0 %v168
    %201 = vmatprep.subr.mxu0 0.0
    %202 = vmatpush1.msra.mxu0 %v169
    %203 = vmatprep.subr.mxu0 0.0
    %204 = vmatpush1.msra.mxu0 %v170
    %205 = vmatprep.subr.mxu0 0.0
    %206 = vmatpush1.msra.mxu0 %v171
    %207 = vmatprep.subr.mxu0 0.0
    %208 = vmatpush1.msra.mxu0 %v172
    %209 = vmatprep.subr.mxu0 0.0
    %210 = vmatpush1.msra.mxu0 %v173
    %211 = vmatprep.subr.mxu0 0.0
    %212 = vmatpush1.msra.mxu0 %v174
    %213 = vmatprep.subr.mxu0 0.0
    %214 = vmatpush1.msra.mxu0 %v175
    %215 = vmatprep.subr.mxu0 0.0
    %216 = vmatpush1.msra.mxu0 0.0
    %217 = vmatprep.subr.mxu0 0.0
    %218 = vmatpush1.msra.mxu0 0.0
    %219 = vmatprep.subr.mxu0 0.0
    %220 = vmatpush1.msra.mxu0 0.0
    %221 = vmatprep.subr.mxu0 0.0
    %222 = vmatpush1.msra.mxu0 0.0
    %223 = vmatprep.subr.mxu0 0.0
    %224 = vmatpush1.msra.mxu0 0.0
    %225 = vmatprep.subr.mxu0 0.0
    %226 = vmatpush1.msra.mxu0 0.0
    %227 = vmatprep.subr.mxu0 0.0
    %228 = vmatpush1.msra.mxu0 0.0
    %229 = vmatprep.subr.mxu0 0.0
    %230 = vmatpush1.msra.mxu0 0.0
    %231 = vmatprep.subr.mxu0 0.0
    %232 = vmatpush1.msra.mxu0 0.0
    %233 = vmatprep.subr.mxu0 0.0
    %234 = vmatpush1.msra.mxu0 0.0
    %235 = vmatprep.subr.mxu0 0.0
    %236 = vmatpush1.msra.mxu0 0.0
    %237 = vmatprep.subr.mxu0 0.0
    %238 = vmatpush1.msra.mxu0 0.0
    %239 = vmatprep.subr.mxu0 0.0
    %240 = vmatpush1.msra.mxu0 0.0
    %241 = vmatprep.subr.mxu0 0.0
    %242 = vmatpush1.msra.mxu0 0.0
    %243 = vmatprep.subr.mxu0 0.0
    %244 = vmatpush1.msra.mxu0 0.0
    %245 = vmatprep.subr.mxu0 0.0
    %246 = vmatpush1.msra.mxu0 0.0
    %247 = vmatprep.mubr.f32.mxu0 0.0
    %248 = vmatmul.mubr.f32.gmra.mrb[0].mxu0 %v159
    %v249 = vpop.f32.mrb[0].mxu0
    %v250 = vadd.f32 %v181, %v249
    %v251 = vpop.f32.mrb[0].mxu0
    %252 = vdwg.mxu0
    %vm253 = vcmp.gt.f32.partialorder %v250, 0.5
    %v254 = vsel %vm253, 1, 0
    %v255 = vcvt.s32.f32 %v254
    %256 = vst [vmem:[#allocation10] sm:$0xff] %v255
    // Predicated region
    $region34: #{tpu_custom_call.1} parent=1 // pred_check
      _
    $region35: #{tpu_custom_call.1} parent=1 // pred_check_branch
      %258 = sbr.rel (0) target = $region37
    $region36: #{tpu_custom_call.1} parent=1 // pred_region
      %s260 = ssub.s32 128, 128
      %261 = vsyncadd [#allocation6], %s260
      %s263 = sshll.u32 [#allocation10], 4
      %s264 = int_to_ptr.vmem [resolvable:$true] %s263
      %266 = dma.vmem_to_hbm [thread:$0]  %s264, 128, %s6, [#allocation6]
    $region37: #{tpu_custom_call.1} parent=1 // pred_fallthru
      _
    // Predicated region
    $region38: #{tpu_custom_call.1} parent=1 // pred_check
      _
    $region39: #{tpu_custom_call.1} parent=1 // pred_check_branch
      %268 = sbr.rel (0) target = $region41
    $region40: #{tpu_custom_call.1} parent=1 // pred_region
      %269 = dma.done [#allocation6], 128
    $region41: #{tpu_custom_call.1} parent=1 // pred_fallthru
      _
    %270 = vsyncpa [#allocation5], 1
    %271 = vsyncpa [#allocation8], 1
    %272 = vsyncpa [#allocation6], 1

</llo_original>
